<compile_context>
chip_gen: v7x
topology: tpu7x:2x2x1
jax: 0.10.0
libtpu: 0.0.40
codegen_flags: <defaults>
</compile_context>

<pallas_src>
import math

import jax
import jax.numpy as jnp
from jax.experimental import pallas as pl
from jax.experimental.pallas import tpu as pltpu

_LANE_CANDIDATES = (4096, 2048, 1024, 512, 256, 128)
_TARGET_BLOCK_BYTES = 2 * 1024 * 1024  # ~2 MiB per buffer (4 buffers < 10 MiB VMEM)


def _mul_add_kernel(x_ref, o_ref):
    # Hot path: elementwise multiply-add on the current tile.
    o_ref[...] = x_ref[...] * 2 + 3


def mul2_add3(x):
    """Pallas equivalent of PtModule.forward: y = x * 2 + 3."""
    orig_shape = x.shape
    total = math.prod(orig_shape)
    itemsize = jnp.dtype(x.dtype).itemsize

    if total % 128 != 0:
        # TODO(synk): sizes not divisible by 128 fall back to a single
        # full-array block (fine for small tensors; very large odd-sized
        # tensors would need a padded tiled path).
        return pl.pallas_call(
            _mul_add_kernel,
            out_shape=jax.ShapeDtypeStruct(orig_shape, x.dtype),
        )(x)

    # Pick the widest lane-dense last dim that divides the element count.
    lane = next(l for l in _LANE_CANDIDATES if total % l == 0)
    rows = total // lane
    flat = x.reshape(rows, lane)  # free layout plumbing for an elementwise op

    # Small-tensor fast path: one full-array block, no grid, no pipeline.
    if rows * lane * itemsize <= _TARGET_BLOCK_BYTES or rows < 8:
        out_flat = pl.pallas_call(
            _mul_add_kernel,
            out_shape=jax.ShapeDtypeStruct((rows, lane), x.dtype),
        )(flat)
        return out_flat.reshape(orig_shape)

    # Large-tensor path: multi-MiB row tiles over the lane-dense slab.
    tm = max(8, min(rows, _TARGET_BLOCK_BYTES // (lane * itemsize)))
    tm = max(8, (tm // 8) * 8)  # sublane-aligned block rows
    grid = (pl.cdiv(rows, tm),)  # partial last block is masked automatically

    out_flat = pl.pallas_call(
        _mul_add_kernel,
        out_shape=jax.ShapeDtypeStruct((rows, lane), x.dtype),
        grid=grid,
        in_specs=[pl.BlockSpec((tm, lane), lambda i: (i, 0))],
        out_specs=pl.BlockSpec((tm, lane), lambda i: (i, 0)),
        compiler_params=pltpu.CompilerParams(
            dimension_semantics=("parallel",),       # shards across v7x's 2 TCs
            vmem_limit_bytes=32 * 1024 * 1024,       # headroom on v5e/v6e/v7x
        ),
    )(flat)
    return out_flat.reshape(orig_shape)


if __name__ == "__main__":
    key = jax.random.PRNGKey(0)
    x = jax.random.normal(key, (2, 4, 16, 16), dtype=jnp.float32)

    out = mul2_add3(x)
    jax.block_until_ready(out)

    # Reference check (same semantics as the PyTorch per-batch loop).
    expected = x * 2 + 3
    assert out.shape == expected.shape, "shape mismatch vs reference"
    assert jnp.allclose(out, expected, atol=1e-6), "mismatch vs reference"

    print("KERNEL_OK")
</pallas_src>

<mosaic_0001>
module attributes {stable_mosaic.version = 11 : i64} {
  func.func @_mul_add_kernel(%arg0: memref<1x2048xf32, #tpu.memory_space<vmem>>, %arg1: memref<1x2048xf32, #tpu.memory_space<vmem>>) attributes {dimension_semantics = [], scalar_prefetch = 0 : i64, scratch_operands = 0 : i64, tpu.core_type = #tpu.core_type<tc>} {
    %c0 = arith.constant 0 : index
    %c0_0 = arith.constant 0 : index
    %0 = vector.load %arg0[%c0, %c0_0] : memref<1x2048xf32, #tpu.memory_space<vmem>>, vector<1x2048xf32>
    %cst = arith.constant 2.000000e+00 : f32
    %1 = vector.broadcast %cst : f32 to vector<1x2048xf32>
    %2 = arith.mulf %0, %1 : vector<1x2048xf32>
    %cst_1 = arith.constant 3.000000e+00 : f32
    %3 = vector.broadcast %cst_1 : f32 to vector<1x2048xf32>
    %4 = arith.addf %2, %3 : vector<1x2048xf32>
    %c0_2 = arith.constant 0 : index
    %c0_3 = arith.constant 0 : index
    %5 = vector.load %arg1[%c0_2, %c0_3] : memref<1x2048xf32, #tpu.memory_space<vmem>>, vector<1x2048xf32>
    tpu.vector_store %arg1[%c0_2, %c0_3], %4 {strides = array<i32>} : memref<1x2048xf32, #tpu.memory_space<vmem>>, vector<1x2048xf32>,
    return
  }
}

</mosaic_0001>

<llo_original>
// kernel: tpu_custom_call.1
$region0: #{tpu_custom_call.1}
  #allocation0 [shape = 'u32[]', space=smem, size = 0x4, offset = 0x4, fixed_abs, tag = 'smem constant byte address 0x4 - core index']
  #allocation1 [shape = 'u32[144,128]{1,0:T(1,128)}', space=vmem, size = 0x12000, scoped, tag = 'internal scratch']
  %s0 = inlined_call_operand.hbm [shape: f32[1,2048], index: 0, kind: input, shape index: {}]
  %s1 = inlined_call_operand.hbm [shape: f32[1,2048], index: 1, kind: output, shape index: {}]
  %s2 = sld [smem:[#allocation0]]
  $region18: #{tpu_custom_call.1} parent=0
    _
  %s4 = ssub.s32 1, %s2
  %s5 = scalar_select 0, %s4, %s2
  $region1: #{tpu_custom_call.1} parent=0
    #allocation2 [shape = 'u8[8192]{0}', space=vmem, size = 0x2000, scoped, tag = 'input window, operand 0, single buffered']
    #allocation3 [shape = 's32[1]{0}', space=sflag, size = 0x4, scoped, tag = 'scoped memory for tpu_custom_call.1']
    #allocation4 [shape = 's32[1]{0}', space=sflag, size = 0x4, scoped, tag = 'scoped memory for tpu_custom_call.1']
    #allocation5 [shape = 'u8[8192]{0}', space=vmem, size = 0x2000, scoped, tag = 'output window, operand 0, single buffered']
    %6 = vsyncpa [#allocation3], 0
    %7 = vsyncpa [#allocation4], 0
    // Predicated region
    $region2: #{tpu_custom_call.1} parent=1 // pred_check
      _
    $region3: #{tpu_custom_call.1} parent=1 // pred_check_branch
      %9 = sbr.rel (0) target = $region5
    $region4: #{tpu_custom_call.1} parent=1 // pred_region
      %s11 = ssub.s32 256, 256
      %12 = vsyncadd [#allocation3], %s11
      %s14 = sshll.u32 [#allocation2], 4
      %s15 = int_to_ptr.vmem [resolvable:$true] %s14
      %17 = dma.hbm_to_vmem [thread:$0]  %s0, 256, %s15, [#allocation3]
    $region5: #{tpu_custom_call.1} parent=1 // pred_fallthru
      _
    // Predicated region
    $region6: #{tpu_custom_call.1} parent=1 // pred_check
      _
    $region7: #{tpu_custom_call.1} parent=1 // pred_check_branch
      %19 = sbr.rel (0) target = $region9
    $region8: #{tpu_custom_call.1} parent=1 // pred_region
      %20 = dma.done [#allocation3], 256
    $region9: #{tpu_custom_call.1} parent=1 // pred_fallthru
      _
    %v21 = vld [vmem:[#allocation2] sm:$0xff]
    %v22 = vld [vmem:[#allocation2 + $0x8] sm:$0xff]
    %v23 = vmul.f32 %v21, 2.0
    %v24 = vmul.f32 %v22, 2.0
    %v25 = vadd.f32 %v23, 3.0
    %v26 = vadd.f32 %v24, 3.0
    %27 = vst [vmem:[#allocation5] sm:$0xff] %v25
    %28 = vst [vmem:[#allocation5 + $0x8] sm:$0xff] %v26
    // Predicated region
    $region10: #{tpu_custom_call.1} parent=1 // pred_check
      _
    $region11: #{tpu_custom_call.1} parent=1 // pred_check_branch
      %30 = sbr.rel (0) target = $region13
    $region12: #{tpu_custom_call.1} parent=1 // pred_region
      %s32 = ssub.s32 256, 256
      %33 = vsyncadd [#allocation4], %s32
      %s35 = sshll.u32 [#allocation5], 4
      %s36 = int_to_ptr.vmem [resolvable:$true] %s35
      %38 = dma.vmem_to_hbm [thread:$0]  %s36, 256, %s1, [#allocation4]
    $region13: #{tpu_custom_call.1} parent=1 // pred_fallthru
      _
    // Predicated region
    $region14: #{tpu_custom_call.1} parent=1 // pred_check
      _
    $region15: #{tpu_custom_call.1} parent=1 // pred_check_branch
      %40 = sbr.rel (0) target = $region17
    $region16: #{tpu_custom_call.1} parent=1 // pred_region
      %41 = dma.done [#allocation4], 256
    $region17: #{tpu_custom_call.1} parent=1 // pred_fallthru
      _
    %42 = vsyncpa [#allocation3], 1
    %43 = vsyncpa [#allocation4], 1

</llo_original>
